<compile_context>
chip_gen: v7x
topology: tpu7x:2x2x1
jax: 0.10.0
libtpu: 0.0.40
codegen_flags: <defaults>
</compile_context>

<pallas_src>
import jax
import jax.numpy as jnp
from jax.experimental import pallas as pl
from jax.experimental.pallas import tpu as pltpu


# ----------------------------------------------------------------------------
# Kernel
# ----------------------------------------------------------------------------
def residual_block_kernel(x_ref, w1_ref, w2_ref, shifts_ref, o_ref):
    x = x_ref[...]                                    # (TM, Hp), model dtype

    # fc1 (+ folded bias/BN1): matmul in weight dtype, f32 accumulator.
    h = jnp.dot(x.astype(w1_ref.dtype), w1_ref[...],
                preferred_element_type=jnp.float32)
    h = h + shifts_ref[0:1, :]                        # folded b1/BN1 shift (f32)
    h = jnp.maximum(h, 0.0)                           # relu

    # dropout: eval mode => identity.
    # TODO(synk): training-mode dropout mask via pltpu.prng_* not emitted.

    # fc2 (+ folded bias/BN2)
    h = jnp.dot(h.astype(w2_ref.dtype), w2_ref[...],
                preferred_element_type=jnp.float32)
    h = h + shifts_ref[1:2, :]                        # folded b2/BN2 shift (f32)

    # residual add + relu (f32 epilogue, then cast to output dtype)
    h = h + x.astype(jnp.float32)
    o_ref[...] = jnp.maximum(h, 0.0).astype(o_ref.dtype)


# ----------------------------------------------------------------------------
# Helpers
# ----------------------------------------------------------------------------
def _round_up(x, m):
    return ((x + m - 1) // m) * m


def _vmem_capacity_bytes():
    try:
        return int(pltpu.get_tpu_info().vmem_capacity_bytes)
    except Exception:
        return 64 * 1024 * 1024     # conservative: v7x per-TC VMEM


def _choose_tile_m(Bp8, Hp, x_itemsize, w_resident_bytes, vmem_budget):
    """Largest TM with <=12.5% batch-padding waste, >=2 grid steps (megacore),
    and a total footprint within the VMEM budget."""
    best = None
    for tm in (512, 256, 128, 64, 32, 16, 8):
        if tm > Bp8:
            continue
        Bp = _round_up(Bp8, tm)
        steps = Bp // tm
        waste_ok = (Bp - Bp8) * 8 <= Bp8                    # <= 12.5% padding
        io_bytes = 2 * 2 * tm * Hp * x_itemsize             # x + out, 2 buffers
        fits = (w_resident_bytes + io_bytes + 2 * Hp * 4 * 2 + (2 << 20)
                ) <= vmem_budget
        if steps >= 2 and waste_ok and fits:
            return tm, Bp
        if best is None and fits:
            best = (tm, Bp)
    if best is None:                                        # tiny-B fallback
        best = (8, _round_up(Bp8, 8))
    return best


def _in_specs(TM, Hp, single_buffer_weights):
    w_kwargs = {}
    if single_buffer_weights:
        # Grid-invariant operands: one pipeline buffer is enough.
        w_kwargs = dict(pipeline_mode=pl.Buffered(1))
    return [
        pl.BlockSpec((TM, Hp), lambda i: (i, 0)),           # x tile (per step)
        pl.BlockSpec((Hp, Hp), lambda i: (0, 0), **w_kwargs),  # W1' (resident)
        pl.BlockSpec((Hp, Hp), lambda i: (0, 0), **w_kwargs),  # W2' (resident)
        pl.BlockSpec((2, Hp), lambda i: (0, 0)),             # packed shifts
    ]


# ----------------------------------------------------------------------------
# One-time parameter folding (hoisted out of the per-call path)
# ----------------------------------------------------------------------------
def fold_residual_block_params(w1, b1, gamma1, beta1, mean1, var1,
                               w2, b2, gamma2, beta2, mean2, var2,
                               *, eps, hidden_pad, store_dtype):
    """Fold Linear bias + BatchNorm1d(eval) into padded weights and shifts:
         y = (x @ W^T + b - mean) * s + beta == x @ (W^T * s) + ((b-mean)*s + beta)
    Call ONCE at model load, not per forward."""
    f32 = jnp.float32
    H = w1.shape[0]
    Hp = hidden_pad

    s1 = gamma1.astype(f32) * jax.lax.rsqrt(var1.astype(f32) + eps)
    s2 = gamma2.astype(f32) * jax.lax.rsqrt(var2.astype(f32) + eps)
    # nn.Linear stores W as (out, in); pre-transpose and scale output columns.
    w1f = w1.T.astype(f32) * s1[None, :]
    w2f = w2.T.astype(f32) * s2[None, :]
    shift1 = (b1.astype(f32) - mean1.astype(f32)) * s1 + beta1.astype(f32)
    shift2 = (b2.astype(f32) - mean2.astype(f32)) * s2 + beta2.astype(f32)

    w1_p = jnp.zeros((Hp, Hp), store_dtype).at[:H, :H].set(w1f.astype(store_dtype))
    w2_p = jnp.zeros((Hp, Hp), store_dtype).at[:H, :H].set(w2f.astype(store_dtype))
    shifts = (jnp.zeros((2, Hp), f32)
              .at[0, :H].set(shift1)
              .at[1, :H].set(shift2))
    return w1_p, w2_p, shifts


# ----------------------------------------------------------------------------
# Public builder: fold once, return a fast forward closure
# ----------------------------------------------------------------------------
def make_residual_block(w1, b1, gamma1, beta1, mean1, var1,
                        w2, b2, gamma2, beta2, mean2, var2,
                        *, eps=1e-5, matmul_dtype=None):
    H = w1.shape[0]
    Hp = _round_up(H, 128)                  # lane-dense, unmasked stores
    store_dtype = matmul_dtype if matmul_dtype is not None else w1.dtype
    w1_p, w2_p, shifts = fold_residual_block_params(
        w1, b1, gamma1, beta1, mean1, var1,
        w2, b2, gamma2, beta2, mean2, var2,
        eps=eps, hidden_pad=Hp, store_dtype=store_dtype)

    w_itemsize = jnp.dtype(store_dtype).itemsize
    vmem_cap = _vmem_capacity_bytes()

    def forward(x):
        B = x.shape[0]
        dtype = x.dtype
        x_itemsize = jnp.dtype(dtype).itemsize
        Bp8 = _round_up(B, 8)

        # Conservative weight footprint (assume double-buffered fallback).
        w_bytes_db = 2 * (2 * Hp * Hp * w_itemsize)
        TM, Bp = _choose_tile_m(Bp8, Hp, x_itemsize, w_bytes_db,
                                int(vmem_cap * 0.85))
        grid = (Bp // TM,)

        x_p = jnp.zeros((Bp, Hp), dtype).at[:B, :H].set(x)

        io_bytes = 2 * 2 * TM * Hp * x_itemsize
        vmem_need = w_bytes_db + io_bytes + 2 * Hp * 4 * 2 + (4 << 20)
        vmem_limit = int(min(max(vmem_need, 32 << 20), vmem_cap))

        compiler_params = pltpu.CompilerParams(
            dimension_semantics=("parallel",),   # batch axis -> both TCs (v7x)
            vmem_limit_bytes=vmem_limit,
        )
        cost = pl.CostEstimate(
            flops=4 * Bp * Hp * Hp,
            transcendentals=0,
            bytes_accessed=(2 * Bp * Hp * x_itemsize        # x in + out
                            + 2 * Hp * Hp * w_itemsize       # both weights
                            + 2 * Hp * 4),                   # shifts
        )
        out_shape = jax.ShapeDtypeStruct((Bp, Hp), dtype)
        out_spec = pl.BlockSpec((TM, Hp), lambda i: (i, 0))

        def _call(single_buffer_weights):
            return pl.pallas_call(
                residual_block_kernel,
                out_shape=out_shape,
                grid=grid,
                in_specs=_in_specs(TM, Hp, single_buffer_weights),
                out_specs=out_spec,
                compiler_params=compiler_params,
                cost_estimate=cost,
            )(x_p, w1_p, w2_p, shifts)

        try:
            out_p = _call(True)       # single-buffered resident weights
        except Exception:
            out_p = _call(False)      # fallback: default double-buffering

        return out_p[:B, :H]

    return forward


# ----------------------------------------------------------------------------
# Pure-JAX reference (eval-mode PyTorch semantics)
# ----------------------------------------------------------------------------
def _reference(x, w1, b1, g1, be1, m1, v1, w2, b2, g2, be2, m2, v2, eps=1e-5):
    def bn(o, g, be, m, v):
        return (o - m) / jnp.sqrt(v + eps) * g + be
    out = x @ w1.T + b1
    out = bn(out, g1, be1, m1, v1)
    out = jnp.maximum(out, 0.0)
    out = out @ w2.T + b2
    out = bn(out, g2, be2, m2, v2)
    out = out + x
    return jnp.maximum(out, 0.0)


if __name__ == "__main__":
    H = 32
    key = jax.random.PRNGKey(0)
    keys = jax.random.split(key, 10)

    bound = 1.0 / jnp.sqrt(H)
    w1 = jax.random.uniform(keys[1], (H, H), jnp.float32, -bound, bound)
    b1 = jax.random.uniform(keys[2], (H,), jnp.float32, -bound, bound)
    w2 = jax.random.uniform(keys[3], (H, H), jnp.float32, -bound, bound)
    b2 = jax.random.uniform(keys[4], (H,), jnp.float32, -bound, bound)

    gamma1 = 1.0 + 0.1 * jax.random.normal(keys[5], (H,), jnp.float32)
    beta1 = 0.1 * jax.random.normal(keys[6], (H,), jnp.float32)
    mean1 = 0.1 * jax.random.normal(keys[7], (H,), jnp.float32)
    var1 = jnp.abs(1.0 + 0.1 * jax.random.normal(keys[8], (H,), jnp.float32))

    gamma2 = 1.0 + 0.05 * jax.random.normal(keys[9], (H,), jnp.float32)
    beta2 = 0.05 * jnp.ones((H,), jnp.float32)
    mean2 = 0.02 * jnp.ones((H,), jnp.float32)
    var2 = 0.9 * jnp.ones((H,), jnp.float32)

    # Fold/pad weights ONCE; reuse the closure for every forward call.
    block = make_residual_block(w1, b1, gamma1, beta1, mean1, var1,
                                w2, b2, gamma2, beta2, mean2, var2)

    # Case 1: tiny batch (single grid step).
    x_small = jax.random.normal(keys[0], (8, H), dtype=jnp.float32)
    out_small = jax.block_until_ready(block(x_small))
    ref_small = _reference(x_small, w1, b1, gamma1, beta1, mean1, var1,
                           w2, b2, gamma2, beta2, mean2, var2)
    assert out_small.shape == (8, H)
    assert jnp.allclose(out_small, ref_small, atol=1e-5, rtol=1e-5), \
        "mismatch vs reference (B=8)"

    # Case 2: non-multiple batch exercising the multi-step grid / adaptive TM.
    x_big = jax.random.normal(jax.random.PRNGKey(1), (40, H), dtype=jnp.float32)
    out_big = jax.block_until_ready(block(x_big))
    ref_big = _reference(x_big, w1, b1, gamma1, beta1, mean1, var1,
                         w2, b2, gamma2, beta2, mean2, var2)
    assert out_big.shape == (40, H)
    assert jnp.allclose(out_big, ref_big, atol=1e-5, rtol=1e-5), \
        "mismatch vs reference (B=40)"

    print("KERNEL_OK")
</pallas_src>

<mosaic_0001>
module attributes {stable_mosaic.version = 11 : i64} {
  func.func @residual_block_kernel(%arg0: i32, %arg1: memref<8x128xf32, #tpu.memory_space<vmem>>, %arg2: memref<128x128xf32, #tpu.memory_space<vmem>>, %arg3: memref<128x128xf32, #tpu.memory_space<vmem>>, %arg4: memref<2x128xf32, #tpu.memory_space<vmem>>, %arg5: memref<8x128xf32, #tpu.memory_space<vmem>>) attributes {dimension_semantics = [#tpu.dimension_semantics<parallel>], iteration_bounds = array<i64: 1>, scalar_prefetch = 0 : i64, scratch_operands = 0 : i64, tpu.core_type = #tpu.core_type<tc>, window_params = [{transform_indices = @transform_0, window_bounds = array<i64: 8, 128>}, {pipeline_mode = #tpu.pipeline_mode<synchronous>, transform_indices = @transform_1, window_bounds = array<i64: 128, 128>}, {pipeline_mode = #tpu.pipeline_mode<synchronous>, transform_indices = @transform_2, window_bounds = array<i64: 128, 128>}, {pipeline_mode = #tpu.pipeline_mode<synchronous>, transform_indices = @transform_3, window_bounds = array<i64: 2, 128>}, {transform_indices = @transform_4, window_bounds = array<i64: 8, 128>}]} {
    %c0 = arith.constant 0 : index
    %c0_0 = arith.constant 0 : index
    %0 = vector.load %arg1[%c0, %c0_0] : memref<8x128xf32, #tpu.memory_space<vmem>>, vector<8x128xf32>
    %c0_1 = arith.constant 0 : index
    %c0_2 = arith.constant 0 : index
    %1 = vector.load %arg2[%c0_1, %c0_2] : memref<128x128xf32, #tpu.memory_space<vmem>>, vector<128x128xf32>
    %cst = arith.constant dense<0.000000e+00> : vector<8x128xf32>
    %2 = tpu.matmul %0, %1, %cst {dimension_numbers = #tpu.dot_dimension_numbers<[1], [0], [0], [1], [0, 0, 1, 1], [], []>} : vector<8x128xf32>, vector<128x128xf32>, vector<8x128xf32> -> vector<8x128xf32>
    %c0_3 = arith.constant 0 : index
    %c0_4 = arith.constant 0 : index
    %3 = vector.load %arg4[%c0_3, %c0_4] : memref<2x128xf32, #tpu.memory_space<vmem>>, vector<1x128xf32>
    %4 = vector.broadcast %3 : vector<1x128xf32> to vector<8x128xf32>
    %5 = arith.addf %2, %4 : vector<8x128xf32>
    %cst_5 = arith.constant 0.000000e+00 : f32
    %6 = vector.broadcast %cst_5 : f32 to vector<8x128xf32>
    %7 = arith.maximumf %5, %6 : vector<8x128xf32>
    %c0_6 = arith.constant 0 : index
    %c0_7 = arith.constant 0 : index
    %8 = vector.load %arg3[%c0_6, %c0_7] : memref<128x128xf32, #tpu.memory_space<vmem>>, vector<128x128xf32>
    %cst_8 = arith.constant dense<0.000000e+00> : vector<8x128xf32>
    %9 = tpu.matmul %7, %8, %cst_8 {dimension_numbers = #tpu.dot_dimension_numbers<[1], [0], [0], [1], [0, 0, 1, 1], [], []>} : vector<8x128xf32>, vector<128x128xf32>, vector<8x128xf32> -> vector<8x128xf32>
    %c1 = arith.constant 1 : index
    %c0_9 = arith.constant 0 : index
    %10 = vector.load %arg4[%c1, %c0_9] : memref<2x128xf32, #tpu.memory_space<vmem>>, vector<1x128xf32>
    %11 = vector.broadcast %10 : vector<1x128xf32> to vector<8x128xf32>
    %12 = arith.addf %9, %11 : vector<8x128xf32>
    %13 = arith.addf %12, %0 : vector<8x128xf32>
    %cst_10 = arith.constant 0.000000e+00 : f32
    %14 = vector.broadcast %cst_10 : f32 to vector<8x128xf32>
    %15 = arith.maximumf %13, %14 : vector<8x128xf32>
    %c0_11 = arith.constant 0 : index
    %c0_12 = arith.constant 0 : index
    %16 = vector.load %arg5[%c0_11, %c0_12] : memref<8x128xf32, #tpu.memory_space<vmem>>, vector<8x128xf32>
    tpu.vector_store %arg5[%c0_11, %c0_12], %15 {strides = array<i32>} : memref<8x128xf32, #tpu.memory_space<vmem>>, vector<8x128xf32>,
    return
  }
  func.func @transform_0(%arg0: i32) -> (i32, i32) {
    %c0_i32 = arith.constant 0 : i32
    %c0_i32_0 = arith.constant 0 : i32
    return %arg0, %c0_i32 : i32, i32
  }
  func.func @transform_1(%arg0: i32) -> (i32, i32) {
    %c0_i32 = arith.constant 0 : i32
    %c0_i32_0 = arith.constant 0 : i32
    %c0_i32_1 = arith.constant 0 : i32
    return %c0_i32, %c0_i32_0 : i32, i32
  }
  func.func @transform_2(%arg0: i32) -> (i32, i32) {
    %c0_i32 = arith.constant 0 : i32
    %c0_i32_0 = arith.constant 0 : i32
    %c0_i32_1 = arith.constant 0 : i32
    return %c0_i32, %c0_i32_0 : i32, i32
  }
  func.func @transform_3(%arg0: i32) -> (i32, i32) {
    %c0_i32 = arith.constant 0 : i32
    %c0_i32_0 = arith.constant 0 : i32
    %c0_i32_1 = arith.constant 0 : i32
    return %c0_i32, %c0_i32_0 : i32, i32
  }
  func.func @transform_4(%arg0: i32) -> (i32, i32) {
    %c0_i32 = arith.constant 0 : i32
    %c0_i32_0 = arith.constant 0 : i32
    return %arg0, %c0_i32 : i32, i32
  }
}

module attributes {stable_mosaic.version = 11 : i64} {
  func.func @residual_block_kernel(%arg0: i32, %arg1: memref<8x128xf32, #tpu.memory_space<vmem>>, %arg2: memref<128x128xf32, #tpu.memory_space<vmem>>, %arg3: memref<128x128xf32, #tpu.memory_space<vmem>>, %arg4: memref<2x128xf32, #tpu.memory_space<vmem>>, %arg5: memref<8x128xf32, #tpu.memory_space<vmem>>) attributes {dimension_semantics = [#tpu.dimension_semantics<parallel>], iteration_bounds = array<i64: 1>, scalar_prefetch = 0 : i64, scratch_operands = 0 : i64, tpu.core_type = #tpu.core_type<tc>, window_params = [{transform_indices = @transform_0, window_bounds = array<i64: 8, 128>}, {pipeline_mode = #tpu.pipeline_mode<synchronous>, transform_indices = @transform_1, window_bounds = array<i64: 128, 128>}, {pipeline_mode = #tpu.pipeline_mode<synchronous>, transform_indices = @transform_2, window_bounds = array<i64: 128, 128>}, {pipeline_mode = #tpu.pipeline_mode<synchronous>, transform_indices = @transform_3, window_bounds = array<i64: 2, 128>}, {transform_indices = @transform_4, window_bounds = array<i64: 8, 128>}]} {
    %c0 = arith.constant 0 : index
    %c0_0 = arith.constant 0 : index
    %0 = vector.load %arg1[%c0, %c0_0] : memref<8x128xf32, #tpu.memory_space<vmem>>, vector<8x128xf32>
    %c0_1 = arith.constant 0 : index
    %c0_2 = arith.constant 0 : index
    %1 = vector.load %arg2[%c0_1, %c0_2] : memref<128x128xf32, #tpu.memory_space<vmem>>, vector<128x128xf32>
    %cst = arith.constant dense<0.000000e+00> : vector<8x128xf32>
    %2 = tpu.matmul %0, %1, %cst {dimension_numbers = #tpu.dot_dimension_numbers<[1], [0], [0], [1], [0, 0, 1, 1], [], []>} : vector<8x128xf32>, vector<128x128xf32>, vector<8x128xf32> -> vector<8x128xf32>
    %c0_3 = arith.constant 0 : index
    %c0_4 = arith.constant 0 : index
    %3 = vector.load %arg4[%c0_3, %c0_4] : memref<2x128xf32, #tpu.memory_space<vmem>>, vector<1x128xf32>
    %4 = vector.broadcast %3 : vector<1x128xf32> to vector<8x128xf32>
    %5 = arith.addf %2, %4 : vector<8x128xf32>
    %cst_5 = arith.constant 0.000000e+00 : f32
    %6 = vector.broadcast %cst_5 : f32 to vector<8x128xf32>
    %7 = arith.maximumf %5, %6 : vector<8x128xf32>
    %c0_6 = arith.constant 0 : index
    %c0_7 = arith.constant 0 : index
    %8 = vector.load %arg3[%c0_6, %c0_7] : memref<128x128xf32, #tpu.memory_space<vmem>>, vector<128x128xf32>
    %cst_8 = arith.constant dense<0.000000e+00> : vector<8x128xf32>
    %9 = tpu.matmul %7, %8, %cst_8 {dimension_numbers = #tpu.dot_dimension_numbers<[1], [0], [0], [1], [0, 0, 1, 1], [], []>} : vector<8x128xf32>, vector<128x128xf32>, vector<8x128xf32> -> vector<8x128xf32>
    %c1 = arith.constant 1 : index
    %c0_9 = arith.constant 0 : index
    %10 = vector.load %arg4[%c1, %c0_9] : memref<2x128xf32, #tpu.memory_space<vmem>>, vector<1x128xf32>
    %11 = vector.broadcast %10 : vector<1x128xf32> to vector<8x128xf32>
    %12 = arith.addf %9, %11 : vector<8x128xf32>
    %13 = arith.addf %12, %0 : vector<8x128xf32>
    %cst_10 = arith.constant 0.000000e+00 : f32
    %14 = vector.broadcast %cst_10 : f32 to vector<8x128xf32>
    %15 = arith.maximumf %13, %14 : vector<8x128xf32>
    %c0_11 = arith.constant 0 : index
    %c0_12 = arith.constant 0 : index
    %16 = vector.load %arg5[%c0_11, %c0_12] : memref<8x128xf32, #tpu.memory_space<vmem>>, vector<8x128xf32>
    tpu.vector_store %arg5[%c0_11, %c0_12], %15 {strides = array<i32>} : memref<8x128xf32, #tpu.memory_space<vmem>>, vector<8x128xf32>,
    return
  }
  func.func @transform_0(%arg0: i32) -> (i32, i32) {
    %c0_i32 = arith.constant 0 : i32
    %c0_i32_0 = arith.constant 0 : i32
    return %arg0, %c0_i32 : i32, i32
  }
  func.func @transform_1(%arg0: i32) -> (i32, i32) {
    %c0_i32 = arith.constant 0 : i32
    %c0_i32_0 = arith.constant 0 : i32
    %c0_i32_1 = arith.constant 0 : i32
    return %c0_i32, %c0_i32_0 : i32, i32
  }
  func.func @transform_2(%arg0: i32) -> (i32, i32) {
    %c0_i32 = arith.constant 0 : i32
    %c0_i32_0 = arith.constant 0 : i32
    %c0_i32_1 = arith.constant 0 : i32
    return %c0_i32, %c0_i32_0 : i32, i32
  }
  func.func @transform_3(%arg0: i32) -> (i32, i32) {
    %c0_i32 = arith.constant 0 : i32
    %c0_i32_0 = arith.constant 0 : i32
    %c0_i32_1 = arith.constant 0 : i32
    return %c0_i32, %c0_i32_0 : i32, i32
  }
  func.func @transform_4(%arg0: i32) -> (i32, i32) {
    %c0_i32 = arith.constant 0 : i32
    %c0_i32_0 = arith.constant 0 : i32
    return %arg0, %c0_i32 : i32, i32
  }
}

</mosaic_0001>

<llo_original>
// kernel: tpu_custom_call.1
$region0: #{tpu_custom_call.1}
  #allocation0 [shape = 'u32[]', space=smem, size = 0x4, offset = 0x4, fixed_abs, tag = 'smem constant byte address 0x4 - core index']
  #allocation1 [shape = 'u32[144,128]{1,0:T(1,128)}', space=vmem, size = 0x12000, scoped, tag = 'internal scratch']
  %s0 = inlined_call_operand.hbm [shape: f32[8,128], index: 0, kind: input, shape index: {}]
  %s1 = inlined_call_operand.hbm [shape: f32[128,128], index: 1, kind: input, shape index: {}]
  %s2 = inlined_call_operand.hbm [shape: f32[128,128], index: 2, kind: input, shape index: {}]
  %s3 = inlined_call_operand.vmem [shape: f32[2,128], index: 3, kind: input, shape index: {}]
  %s4 = inlined_call_operand.hbm [shape: f32[8,128], index: 4, kind: output, shape index: {}]
  %s5 = sld [smem:[#allocation0]]
  $region38: #{tpu_custom_call.1} parent=0
    _
  %s7 = ssub.s32 1, %s5
  %s8 = scalar_select 0, %s7, %s5
  $region1: #{tpu_custom_call.1} parent=0
    #allocation2 [shape = 'u8[4096]{0}', space=vmem, size = 0x1000, scoped, tag = 'input window, operand 0, single buffered']
    #allocation3 [shape = 's32[1]{0}', space=sflag, size = 0x4, scoped, tag = 'scoped memory for tpu_custom_call.1']
    #allocation4 [shape = 's32[1]{0}', space=sflag, size = 0x4, scoped, tag = 'scoped memory for tpu_custom_call.1']
    #allocation5 [shape = 'u8[65536]{0}', space=vmem, size = 0x10000, scoped, tag = 'input window, operand 1, single buffered']
    #allocation6 [shape = 's32[1]{0}', space=sflag, size = 0x4, scoped, tag = 'scoped memory for tpu_custom_call.1']
    #allocation7 [shape = 'u8[65536]{0}', space=vmem, size = 0x10000, scoped, tag = 'input window, operand 2, single buffered']
    #allocation8 [shape = 'u8[4096]{0}', space=vmem, size = 0x1000, scoped, tag = 'output window, operand 0, single buffered']
    %9 = vsyncpa [#allocation3], 0
    %10 = vsyncpa [#allocation6], 0
    %11 = vsyncpa [#allocation4], 0
    // Predicated region
    $region2: #{tpu_custom_call.1} parent=1 // pred_check
      _
    $region3: #{tpu_custom_call.1} parent=1 // pred_check_branch
      %13 = sbr.rel (0) target = $region5
    $region4: #{tpu_custom_call.1} parent=1 // pred_region
      %s15 = ssub.s32 128, 128
      %16 = vsyncadd [#allocation3], %s15
      %s18 = sshll.u32 [#allocation2], 4
      %s19 = int_to_ptr.vmem [resolvable:$true] %s18
      %21 = dma.hbm_to_vmem [thread:$0]  %s0, 128, %s19, [#allocation3]
    $region5: #{tpu_custom_call.1} parent=1 // pred_fallthru
      _
    // Predicated region
    $region6: #{tpu_custom_call.1} parent=1 // pred_check
      _
    $region7: #{tpu_custom_call.1} parent=1 // pred_check_branch
      %23 = sbr.rel (0) target = $region9
    $region8: #{tpu_custom_call.1} parent=1 // pred_region
      %s25 = ssub.s32 2048, 2048
      %26 = vsyncadd [#allocation6], %s25
      %s27 = sshll.u32 [#allocation5], 4
      %s28 = int_to_ptr.vmem [resolvable:$true] %s27
      %33 = dma.hbm_to_vmem [thread:$0]  %s1, 2048, %s28, [#allocation6], 128, 128, 8
    $region9: #{tpu_custom_call.1} parent=1 // pred_fallthru
      _
    // Predicated region
    $region10: #{tpu_custom_call.1} parent=1 // pred_check
      _
    $region11: #{tpu_custom_call.1} parent=1 // pred_check_branch
      %35 = sbr.rel (0) target = $region13
    $region12: #{tpu_custom_call.1} parent=1 // pred_region
      %s37 = ssub.s32 2048, 2048
      %38 = vsyncadd [#allocation6], %s37
      %s39 = sshll.u32 [#allocation7], 4
      %s40 = int_to_ptr.vmem [resolvable:$true] %s39
      %45 = dma.hbm_to_vmem [thread:$0]  %s2, 2048, %s40, [#allocation6], 128, 128, 8
    $region13: #{tpu_custom_call.1} parent=1 // pred_fallthru
      _
    // Predicated region
    $region14: #{tpu_custom_call.1} parent=1 // pred_check
      _
    $region15: #{tpu_custom_call.1} parent=1 // pred_check_branch
      %47 = sbr.rel (0) target = $region17
    $region16: #{tpu_custom_call.1} parent=1 // pred_region
      _
    $region17: #{tpu_custom_call.1} parent=1 // pred_fallthru
      _
    // Predicated region
    $region18: #{tpu_custom_call.1} parent=1 // pred_check
      _
    $region19: #{tpu_custom_call.1} parent=1 // pred_check_branch
      %49 = sbr.rel (0) target = $region21
    $region20: #{tpu_custom_call.1} parent=1 // pred_region
      %50 = dma.done [#allocation3], 128
    $region21: #{tpu_custom_call.1} parent=1 // pred_fallthru
      _
    // Predicated region
    $region22: #{tpu_custom_call.1} parent=1 // pred_check
      _
    $region23: #{tpu_custom_call.1} parent=1 // pred_check_branch
      %52 = sbr.rel (0) target = $region25
    $region24: #{tpu_custom_call.1} parent=1 // pred_region
      %53 = dma.done [#allocation6], 2048
    $region25: #{tpu_custom_call.1} parent=1 // pred_fallthru
      _
    // Predicated region
    $region26: #{tpu_custom_call.1} parent=1 // pred_check
      _
    $region27: #{tpu_custom_call.1} parent=1 // pred_check_branch
      %55 = sbr.rel (0) target = $region29
    $region28: #{tpu_custom_call.1} parent=1 // pred_region
      %56 = dma.done [#allocation6], 2048
    $region29: #{tpu_custom_call.1} parent=1 // pred_fallthru
      _
    %v57 = vld [vmem:[#allocation2] sm:$0xff]
    %v58 = vld [vmem:[#allocation5] sm:$0xff]
    %v59 = vld [vmem:[#allocation5 + $0x8] sm:$0xff]
    %v60 = vld [vmem:[#allocation5 + $0x10] sm:$0xff]
    %v61 = vld [vmem:[#allocation5 + $0x18] sm:$0xff]
    %v62 = vld [vmem:[#allocation5 + $0x20] sm:$0xff]
    %v63 = vld [vmem:[#allocation5 + $0x28] sm:$0xff]
    %v64 = vld [vmem:[#allocation5 + $0x30] sm:$0xff]
    %v65 = vld [vmem:[#allocation5 + $0x38] sm:$0xff]
    %v66 = vld [vmem:[#allocation5 + $0x40] sm:$0xff]
    %v67 = vld [vmem:[#allocation5 + $0x48] sm:$0xff]
    %v68 = vld [vmem:[#allocation5 + $0x50] sm:$0xff]
    %v69 = vld [vmem:[#allocation5 + $0x58] sm:$0xff]
    %v70 = vld [vmem:[#allocation5 + $0x60] sm:$0xff]
    %v71 = vld [vmem:[#allocation5 + $0x68] sm:$0xff]
    %v72 = vld [vmem:[#allocation5 + $0x70] sm:$0xff]
    %v73 = vld [vmem:[#allocation5 + $0x78] sm:$0xff]
    %v74 = vld [vmem:[%s3] sm:$0x1]
    %v75 = vlaneseq
    %v76 = vshrl.u32 %v75, 7
    %v77 = vsub.s32 0, %v76
    %v78 = vrot.slane %v74, %v77
    %79 = vmatprep.subr.mxu0 0.0
    %80 = vmatpush1.msra.mxu0 %v58
    %81 = vmatprep.subr.mxu0 0.0
    %82 = vmatpush1.msra.mxu0 %v59
    %83 = vmatprep.subr.mxu0 0.0
    %84 = vmatpush1.msra.mxu0 %v60
    %85 = vmatprep.subr.mxu0 0.0
    %86 = vmatpush1.msra.mxu0 %v61
    %87 = vmatprep.subr.mxu0 0.0
    %88 = vmatpush1.msra.mxu0 %v62
    %89 = vmatprep.subr.mxu0 0.0
    %90 = vmatpush1.msra.mxu0 %v63
    %91 = vmatprep.subr.mxu0 0.0
    %92 = vmatpush1.msra.mxu0 %v64
    %93 = vmatprep.subr.mxu0 0.0
    %94 = vmatpush1.msra.mxu0 %v65
    %95 = vmatprep.subr.mxu0 0.0
    %96 = vmatpush1.msra.mxu0 %v66
    %97 = vmatprep.subr.mxu0 0.0
    %98 = vmatpush1.msra.mxu0 %v67
    %99 = vmatprep.subr.mxu0 0.0
    %100 = vmatpush1.msra.mxu0 %v68
    %101 = vmatprep.subr.mxu0 0.0
    %102 = vmatpush1.msra.mxu0 %v69
    %103 = vmatprep.subr.mxu0 0.0
    %104 = vmatpush1.msra.mxu0 %v70
    %105 = vmatprep.subr.mxu0 0.0
    %106 = vmatpush1.msra.mxu0 %v71
    %107 = vmatprep.subr.mxu0 0.0
    %108 = vmatpush1.msra.mxu0 %v72
    %109 = vmatprep.subr.mxu0 0.0
    %110 = vmatpush1.msra.mxu0 %v73
    %111 = vmatprep.subr.mxu0 0.0
    %112 = vmatpush1.msra.mxu0 0.0
    %113 = vmatprep.subr.mxu0 0.0
    %114 = vmatpush1.msra.mxu0 0.0
    %115 = vmatprep.subr.mxu0 0.0
    %116 = vmatpush1.msra.mxu0 0.0
    %117 = vmatprep.subr.mxu0 0.0
    %118 = vmatpush1.msra.mxu0 0.0
    %119 = vmatprep.subr.mxu0 0.0
    %120 = vmatpush1.msra.mxu0 0.0
    %121 = vmatprep.subr.mxu0 0.0
    %122 = vmatpush1.msra.mxu0 0.0
    %123 = vmatprep.subr.mxu0 0.0
    %124 = vmatpush1.msra.mxu0 0.0
    %125 = vmatprep.subr.mxu0 0.0
    %126 = vmatpush1.msra.mxu0 0.0
    %127 = vmatprep.subr.mxu0 0.0
    %128 = vmatpush1.msra.mxu0 0.0
    %129 = vmatprep.subr.mxu0 0.0
    %130 = vmatpush1.msra.mxu0 0.0
    %131 = vmatprep.subr.mxu0 0.0
    %132 = vmatpush1.msra.mxu0 0.0
    %133 = vmatprep.subr.mxu0 0.0
    %134 = vmatpush1.msra.mxu0 0.0
    %135 = vmatprep.subr.mxu0 0.0
    %136 = vmatpush1.msra.mxu0 0.0
    %137 = vmatprep.subr.mxu0 0.0
    %138 = vmatpush1.msra.mxu0 0.0
    %139 = vmatprep.subr.mxu0 0.0
    %140 = vmatpush1.msra.mxu0 0.0
    %141 = vmatprep.subr.mxu0 0.0
    %142 = vmatpush1.msra.mxu0 0.0
    %143 = vmatprep.mubr.f32.mxu0 0.0
    %144 = vmatmul.mubr.f32.gmra.mrb[0].mxu0 %v57
    %v145 = vpop.f32.mrb[0].mxu0
    %v146 = vadd.f32 %v78, %v145
    %v147 = vpop.f32.mrb[0].mxu0
    %148 = vdwg.mxu0
    %v149 = vmax.f32 %v146, 0.0
    %v150 = vld [vmem:[#allocation7] sm:$0xff]
    %v151 = vld [vmem:[#allocation7 + $0x8] sm:$0xff]
    %v152 = vld [vmem:[#allocation7 + $0x10] sm:$0xff]
    %v153 = vld [vmem:[#allocation7 + $0x18] sm:$0xff]
    %v154 = vld [vmem:[#allocation7 + $0x20] sm:$0xff]
    %v155 = vld [vmem:[#allocation7 + $0x28] sm:$0xff]
    %v156 = vld [vmem:[#allocation7 + $0x30] sm:$0xff]
    %v157 = vld [vmem:[#allocation7 + $0x38] sm:$0xff]
    %v158 = vld [vmem:[#allocation7 + $0x40] sm:$0xff]
    %v159 = vld [vmem:[#allocation7 + $0x48] sm:$0xff]
    %v160 = vld [vmem:[#allocation7 + $0x50] sm:$0xff]
    %v161 = vld [vmem:[#allocation7 + $0x58] sm:$0xff]
    %v162 = vld [vmem:[#allocation7 + $0x60] sm:$0xff]
    %v163 = vld [vmem:[#allocation7 + $0x68] sm:$0xff]
    %v164 = vld [vmem:[#allocation7 + $0x70] sm:$0xff]
    %v165 = vld [vmem:[#allocation7 + $0x78] sm:$0xff]
    %v166 = vld [vmem:[%s3 + $0x1] sm:$0x1]
    %v167 = vlaneseq
    %v168 = vshrl.u32 %v167, 7
    %v169 = vsub.s32 0, %v168
    %v170 = vrot.slane %v166, %v169
    %171 = vmatprep.subr.mxu0 0.0
    %172 = vmatpush1.msra.mxu0 %v150
    %173 = vmatprep.subr.mxu0 0.0
    %174 = vmatpush1.msra.mxu0 %v151
    %175 = vmatprep.subr.mxu0 0.0
    %176 = vmatpush1.msra.mxu0 %v152
    %177 = vmatprep.subr.mxu0 0.0
    %178 = vmatpush1.msra.mxu0 %v153
    %179 = vmatprep.subr.mxu0 0.0
    %180 = vmatpush1.msra.mxu0 %v154
    %181 = vmatprep.subr.mxu0 0.0
    %182 = vmatpush1.msra.mxu0 %v155
    %183 = vmatprep.subr.mxu0 0.0
    %184 = vmatpush1.msra.mxu0 %v156
    %185 = vmatprep.subr.mxu0 0.0
    %186 = vmatpush1.msra.mxu0 %v157
    %187 = vmatprep.subr.mxu0 0.0
    %188 = vmatpush1.msra.mxu0 %v158
    %189 = vmatprep.subr.mxu0 0.0
    %190 = vmatpush1.msra.mxu0 %v159
    %191 = vmatprep.subr.mxu0 0.0
    %192 = vmatpush1.msra.mxu0 %v160
    %193 = vmatprep.subr.mxu0 0.0
    %194 = vmatpush1.msra.mxu0 %v161
    %195 = vmatprep.subr.mxu0 0.0
    %196 = vmatpush1.msra.mxu0 %v162
    %197 = vmatprep.subr.mxu0 0.0
    %198 = vmatpush1.msra.mxu0 %v163
    %199 = vmatprep.subr.mxu0 0.0
    %200 = vmatpush1.msra.mxu0 %v164
    %201 = vmatprep.subr.mxu0 0.0
    %202 = vmatpush1.msra.mxu0 %v165
    %203 = vmatprep.subr.mxu0 0.0
    %204 = vmatpush1.msra.mxu0 0.0
    %205 = vmatprep.subr.mxu0 0.0
    %206 = vmatpush1.msra.mxu0 0.0
    %207 = vmatprep.subr.mxu0 0.0
    %208 = vmatpush1.msra.mxu0 0.0
    %209 = vmatprep.subr.mxu0 0.0
    %210 = vmatpush1.msra.mxu0 0.0
    %211 = vmatprep.subr.mxu0 0.0
    %212 = vmatpush1.msra.mxu0 0.0
    %213 = vmatprep.subr.mxu0 0.0
    %214 = vmatpush1.msra.mxu0 0.0
    %215 = vmatprep.subr.mxu0 0.0
    %216 = vmatpush1.msra.mxu0 0.0
    %217 = vmatprep.subr.mxu0 0.0
    %218 = vmatpush1.msra.mxu0 0.0
    %219 = vmatprep.subr.mxu0 0.0
    %220 = vmatpush1.msra.mxu0 0.0
    %221 = vmatprep.subr.mxu0 0.0
    %222 = vmatpush1.msra.mxu0 0.0
    %223 = vmatprep.subr.mxu0 0.0
    %224 = vmatpush1.msra.mxu0 0.0
    %225 = vmatprep.subr.mxu0 0.0
    %226 = vmatpush1.msra.mxu0 0.0
    %227 = vmatprep.subr.mxu0 0.0
    %228 = vmatpush1.msra.mxu0 0.0
    %229 = vmatprep.subr.mxu0 0.0
    %230 = vmatpush1.msra.mxu0 0.0
    %231 = vmatprep.subr.mxu0 0.0
    %232 = vmatpush1.msra.mxu0 0.0
    %233 = vmatprep.subr.mxu0 0.0
    %234 = vmatpush1.msra.mxu0 0.0
    %235 = vmatprep.mubr.f32.mxu0 0.0
    %236 = vmatmul.mubr.f32.gmra.mrb[0].mxu0 %v149
    %v237 = vpop.f32.mrb[0].mxu0
    %v238 = vadd.f32 %v170, %v237
    %v239 = vpop.f32.mrb[0].mxu0
    %240 = vdwg.mxu0
    %v241 = vadd.f32 %v238, %v57
    %v242 = vmax.f32 %v241, 0.0
    %243 = vst [vmem:[#allocation8] sm:$0xff] %v242
    // Predicated region
    $region30: #{tpu_custom_call.1} parent=1 // pred_check
      _
    $region31: #{tpu_custom_call.1} parent=1 // pred_check_branch
      %245 = sbr.rel (0) target = $region33
    $region32: #{tpu_custom_call.1} parent=1 // pred_region
      %s247 = ssub.s32 128, 128
      %248 = vsyncadd [#allocation4], %s247
      %s250 = sshll.u32 [#allocation8], 4
      %s251 = int_to_ptr.vmem [resolvable:$true] %s250
      %253 = dma.vmem_to_hbm [thread:$0]  %s251, 128, %s4, [#allocation4]
    $region33: #{tpu_custom_call.1} parent=1 // pred_fallthru
      _
    // Predicated region
    $region34: #{tpu_custom_call.1} parent=1 // pred_check
      _
    $region35: #{tpu_custom_call.1} parent=1 // pred_check_branch
      %255 = sbr.rel (0) target = $region37
    $region36: #{tpu_custom_call.1} parent=1 // pred_region
      %256 = dma.done [#allocation4], 128
    $region37: #{tpu_custom_call.1} parent=1 // pred_fallthru
      _
    %257 = vsyncpa [#allocation3], 1
    %258 = vsyncpa [#allocation6], 1
    %259 = vsyncpa [#allocation4], 1

// kernel: tpu_custom_call.1
$region0: #{tpu_custom_call.1}
  #allocation0 [shape = 'u32[]', space=smem, size = 0x4, offset = 0x4, fixed_abs, tag = 'smem constant byte address 0x4 - core index']
  #allocation1 [shape = 'u32[144,128]{1,0:T(1,128)}', space=vmem, size = 0x12000, scoped, tag = 'internal scratch']
  %s0 = inlined_call_operand.hbm [shape: f32[8,128], index: 0, kind: input, shape index: {}]
  %s1 = inlined_call_operand.hbm [shape: f32[128,128], index: 1, kind: input, shape index: {}]
  %s2 = inlined_call_operand.hbm [shape: f32[128,128], index: 2, kind: input, shape index: {}]
  %s3 = inlined_call_operand.vmem [shape: f32[2,128], index: 3, kind: input, shape index: {}]
  %s4 = inlined_call_operand.hbm [shape: f32[8,128], index: 4, kind: output, shape index: {}]
  %s5 = sld [smem:[#allocation0]]
  $region38: #{tpu_custom_call.1} parent=0
    _
  %s7 = ssub.s32 1, %s5
  %s8 = scalar_select 0, %s7, %s5
  $region1: #{tpu_custom_call.1} parent=0
    #allocation2 [shape = 'u8[4096]{0}', space=vmem, size = 0x1000, scoped, tag = 'input window, operand 0, single buffered']
    #allocation3 [shape = 's32[1]{0}', space=sflag, size = 0x4, scoped, tag = 'scoped memory for tpu_custom_call.1']
    #allocation4 [shape = 's32[1]{0}', space=sflag, size = 0x4, scoped, tag = 'scoped memory for tpu_custom_call.1']
    #allocation5 [shape = 'u8[65536]{0}', space=vmem, size = 0x10000, scoped, tag = 'input window, operand 1, single buffered']
    #allocation6 [shape = 's32[1]{0}', space=sflag, size = 0x4, scoped, tag = 'scoped memory for tpu_custom_call.1']
    #allocation7 [shape = 'u8[65536]{0}', space=vmem, size = 0x10000, scoped, tag = 'input window, operand 2, single buffered']
    #allocation8 [shape = 'u8[4096]{0}', space=vmem, size = 0x1000, scoped, tag = 'output window, operand 0, single buffered']
    %9 = vsyncpa [#allocation3], 0
    %10 = vsyncpa [#allocation6], 0
    %11 = vsyncpa [#allocation4], 0
    // Predicated region
    $region2: #{tpu_custom_call.1} parent=1 // pred_check
      _
    $region3: #{tpu_custom_call.1} parent=1 // pred_check_branch
      %13 = sbr.rel (0) target = $region5
    $region4: #{tpu_custom_call.1} parent=1 // pred_region
      %s15 = ssub.s32 128, 128
      %16 = vsyncadd [#allocation3], %s15
      %s18 = sshll.u32 [#allocation2], 4
      %s19 = int_to_ptr.vmem [resolvable:$true] %s18
      %21 = dma.hbm_to_vmem [thread:$0]  %s0, 128, %s19, [#allocation3]
    $region5: #{tpu_custom_call.1} parent=1 // pred_fallthru
      _
    // Predicated region
    $region6: #{tpu_custom_call.1} parent=1 // pred_check
      _
    $region7: #{tpu_custom_call.1} parent=1 // pred_check_branch
      %23 = sbr.rel (0) target = $region9
    $region8: #{tpu_custom_call.1} parent=1 // pred_region
      %s25 = ssub.s32 2048, 2048
      %26 = vsyncadd [#allocation6], %s25
      %s27 = sshll.u32 [#allocation5], 4
      %s28 = int_to_ptr.vmem [resolvable:$true] %s27
      %33 = dma.hbm_to_vmem [thread:$0]  %s1, 2048, %s28, [#allocation6], 128, 128, 8
    $region9: #{tpu_custom_call.1} parent=1 // pred_fallthru
      _
    // Predicated region
    $region10: #{tpu_custom_call.1} parent=1 // pred_check
      _
    $region11: #{tpu_custom_call.1} parent=1 // pred_check_branch
      %35 = sbr.rel (0) target = $region13
    $region12: #{tpu_custom_call.1} parent=1 // pred_region
      %s37 = ssub.s32 2048, 2048
      %38 = vsyncadd [#allocation6], %s37
      %s39 = sshll.u32 [#allocation7], 4
      %s40 = int_to_ptr.vmem [resolvable:$true] %s39
      %45 = dma.hbm_to_vmem [thread:$0]  %s2, 2048, %s40, [#allocation6], 128, 128, 8
    $region13: #{tpu_custom_call.1} parent=1 // pred_fallthru
      _
    // Predicated region
    $region14: #{tpu_custom_call.1} parent=1 // pred_check
      _
    $region15: #{tpu_custom_call.1} parent=1 // pred_check_branch
      %47 = sbr.rel (0) target = $region17
    $region16: #{tpu_custom_call.1} parent=1 // pred_region
      _
    $region17: #{tpu_custom_call.1} parent=1 // pred_fallthru
      _
    // Predicated region
    $region18: #{tpu_custom_call.1} parent=1 // pred_check
      _
    $region19: #{tpu_custom_call.1} parent=1 // pred_check_branch
      %49 = sbr.rel (0) target = $region21
    $region20: #{tpu_custom_call.1} parent=1 // pred_region
      %50 = dma.done [#allocation3], 128
    $region21: #{tpu_custom_call.1} parent=1 // pred_fallthru
      _
    // Predicated region
    $region22: #{tpu_custom_call.1} parent=1 // pred_check
      _
    $region23: #{tpu_custom_call.1} parent=1 // pred_check_branch
      %52 = sbr.rel (0) target = $region25
    $region24: #{tpu_custom_call.1} parent=1 // pred_region
      %53 = dma.done [#allocation6], 2048
    $region25: #{tpu_custom_call.1} parent=1 // pred_fallthru
      _
    // Predicated region
    $region26: #{tpu_custom_call.1} parent=1 // pred_check
      _
    $region27: #{tpu_custom_call.1} parent=1 // pred_check_branch
      %55 = sbr.rel (0) target = $region29
    $region28: #{tpu_custom_call.1} parent=1 // pred_region
      %56 = dma.done [#allocation6], 2048
    $region29: #{tpu_custom_call.1} parent=1 // pred_fallthru
      _
    %v57 = vld [vmem:[#allocation2] sm:$0xff]
    %v58 = vld [vmem:[#allocation5] sm:$0xff]
    %v59 = vld [vmem:[#allocation5 + $0x8] sm:$0xff]
    %v60 = vld [vmem:[#allocation5 + $0x10] sm:$0xff]
    %v61 = vld [vmem:[#allocation5 + $0x18] sm:$0xff]
    %v62 = vld [vmem:[#allocation5 + $0x20] sm:$0xff]
    %v63 = vld [vmem:[#allocation5 + $0x28] sm:$0xff]
    %v64 = vld [vmem:[#allocation5 + $0x30] sm:$0xff]
    %v65 = vld [vmem:[#allocation5 + $0x38] sm:$0xff]
    %v66 = vld [vmem:[#allocation5 + $0x40] sm:$0xff]
    %v67 = vld [vmem:[#allocation5 + $0x48] sm:$0xff]
    %v68 = vld [vmem:[#allocation5 + $0x50] sm:$0xff]
    %v69 = vld [vmem:[#allocation5 + $0x58] sm:$0xff]
    %v70 = vld [vmem:[#allocation5 + $0x60] sm:$0xff]
    %v71 = vld [vmem:[#allocation5 + $0x68] sm:$0xff]
    %v72 = vld [vmem:[#allocation5 + $0x70] sm:$0xff]
    %v73 = vld [vmem:[#allocation5 + $0x78] sm:$0xff]
    %v74 = vld [vmem:[%s3] sm:$0x1]
    %v75 = vlaneseq
    %v76 = vshrl.u32 %v75, 7
    %v77 = vsub.s32 0, %v76
    %v78 = vrot.slane %v74, %v77
    %79 = vmatprep.subr.mxu0 0.0
    %80 = vmatpush1.msra.mxu0 %v58
    %81 = vmatprep.subr.mxu0 0.0
    %82 = vmatpush1.msra.mxu0 %v59
    %83 = vmatprep.subr.mxu0 0.0
    %84 = vmatpush1.msra.mxu0 %v60
    %85 = vmatprep.subr.mxu0 0.0
    %86 = vmatpush1.msra.mxu0 %v61
    %87 = vmatprep.subr.mxu0 0.0
    %88 = vmatpush1.msra.mxu0 %v62
    %89 = vmatprep.subr.mxu0 0.0
    %90 = vmatpush1.msra.mxu0 %v63
    %91 = vmatprep.subr.mxu0 0.0
    %92 = vmatpush1.msra.mxu0 %v64
    %93 = vmatprep.subr.mxu0 0.0
    %94 = vmatpush1.msra.mxu0 %v65
    %95 = vmatprep.subr.mxu0 0.0
    %96 = vmatpush1.msra.mxu0 %v66
    %97 = vmatprep.subr.mxu0 0.0
    %98 = vmatpush1.msra.mxu0 %v67
    %99 = vmatprep.subr.mxu0 0.0
    %100 = vmatpush1.msra.mxu0 %v68
    %101 = vmatprep.subr.mxu0 0.0
    %102 = vmatpush1.msra.mxu0 %v69
    %103 = vmatprep.subr.mxu0 0.0
    %104 = vmatpush1.msra.mxu0 %v70
    %105 = vmatprep.subr.mxu0 0.0
    %106 = vmatpush1.msra.mxu0 %v71
    %107 = vmatprep.subr.mxu0 0.0
    %108 = vmatpush1.msra.mxu0 %v72
    %109 = vmatprep.subr.mxu0 0.0
    %110 = vmatpush1.msra.mxu0 %v73
    %111 = vmatprep.subr.mxu0 0.0
    %112 = vmatpush1.msra.mxu0 0.0
    %113 = vmatprep.subr.mxu0 0.0
    %114 = vmatpush1.msra.mxu0 0.0
    %115 = vmatprep.subr.mxu0 0.0
    %116 = vmatpush1.msra.mxu0 0.0
    %117 = vmatprep.subr.mxu0 0.0
    %118 = vmatpush1.msra.mxu0 0.0
    %119 = vmatprep.subr.mxu0 0.0
    %120 = vmatpush1.msra.mxu0 0.0
    %121 = vmatprep.subr.mxu0 0.0
    %122 = vmatpush1.msra.mxu0 0.0
    %123 = vmatprep.subr.mxu0 0.0
    %124 = vmatpush1.msra.mxu0 0.0
    %125 = vmatprep.subr.mxu0 0.0
    %126 = vmatpush1.msra.mxu0 0.0
    %127 = vmatprep.subr.mxu0 0.0
    %128 = vmatpush1.msra.mxu0 0.0
    %129 = vmatprep.subr.mxu0 0.0
    %130 = vmatpush1.msra.mxu0 0.0
    %131 = vmatprep.subr.mxu0 0.0
    %132 = vmatpush1.msra.mxu0 0.0
    %133 = vmatprep.subr.mxu0 0.0
    %134 = vmatpush1.msra.mxu0 0.0
    %135 = vmatprep.subr.mxu0 0.0
    %136 = vmatpush1.msra.mxu0 0.0
    %137 = vmatprep.subr.mxu0 0.0
    %138 = vmatpush1.msra.mxu0 0.0
    %139 = vmatprep.subr.mxu0 0.0
    %140 = vmatpush1.msra.mxu0 0.0
    %141 = vmatprep.subr.mxu0 0.0
    %142 = vmatpush1.msra.mxu0 0.0
    %143 = vmatprep.mubr.f32.mxu0 0.0
    %144 = vmatmul.mubr.f32.gmra.mrb[0].mxu0 %v57
    %v145 = vpop.f32.mrb[0].mxu0
    %v146 = vadd.f32 %v78, %v145
    %v147 = vpop.f32.mrb[0].mxu0
    %148 = vdwg.mxu0
    %v149 = vmax.f32 %v146, 0.0
    %v150 = vld [vmem:[#allocation7] sm:$0xff]
    %v151 = vld [vmem:[#allocation7 + $0x8] sm:$0xff]
    %v152 = vld [vmem:[#allocation7 + $0x10] sm:$0xff]
    %v153 = vld [vmem:[#allocation7 + $0x18] sm:$0xff]
    %v154 = vld [vmem:[#allocation7 + $0x20] sm:$0xff]
    %v155 = vld [vmem:[#allocation7 + $0x28] sm:$0xff]
    %v156 = vld [vmem:[#allocation7 + $0x30] sm:$0xff]
    %v157 = vld [vmem:[#allocation7 + $0x38] sm:$0xff]
    %v158 = vld [vmem:[#allocation7 + $0x40] sm:$0xff]
    %v159 = vld [vmem:[#allocation7 + $0x48] sm:$0xff]
    %v160 = vld [vmem:[#allocation7 + $0x50] sm:$0xff]
    %v161 = vld [vmem:[#allocation7 + $0x58] sm:$0xff]
    %v162 = vld [vmem:[#allocation7 + $0x60] sm:$0xff]
    %v163 = vld [vmem:[#allocation7 + $0x68] sm:$0xff]
    %v164 = vld [vmem:[#allocation7 + $0x70] sm:$0xff]
    %v165 = vld [vmem:[#allocation7 + $0x78] sm:$0xff]
    %v166 = vld [vmem:[%s3 + $0x1] sm:$0x1]
    %v167 = vlaneseq
    %v168 = vshrl.u32 %v167, 7
    %v169 = vsub.s32 0, %v168
    %v170 = vrot.slane %v166, %v169
    %171 = vmatprep.subr.mxu0 0.0
    %172 = vmatpush1.msra.mxu0 %v150
    %173 = vmatprep.subr.mxu0 0.0
    %174 = vmatpush1.msra.mxu0 %v151
    %175 = vmatprep.subr.mxu0 0.0
    %176 = vmatpush1.msra.mxu0 %v152
    %177 = vmatprep.subr.mxu0 0.0
    %178 = vmatpush1.msra.mxu0 %v153
    %179 = vmatprep.subr.mxu0 0.0
    %180 = vmatpush1.msra.mxu0 %v154
    %181 = vmatprep.subr.mxu0 0.0
    %182 = vmatpush1.msra.mxu0 %v155
    %183 = vmatprep.subr.mxu0 0.0
    %184 = vmatpush1.msra.mxu0 %v156
    %185 = vmatprep.subr.mxu0 0.0
    %186 = vmatpush1.msra.mxu0 %v157
    %187 = vmatprep.subr.mxu0 0.0
    %188 = vmatpush1.msra.mxu0 %v158
    %189 = vmatprep.subr.mxu0 0.0
    %190 = vmatpush1.msra.mxu0 %v159
    %191 = vmatprep.subr.mxu0 0.0
    %192 = vmatpush1.msra.mxu0 %v160
    %193 = vmatprep.subr.mxu0 0.0
    %194 = vmatpush1.msra.mxu0 %v161
    %195 = vmatprep.subr.mxu0 0.0
    %196 = vmatpush1.msra.mxu0 %v162
    %197 = vmatprep.subr.mxu0 0.0
    %198 = vmatpush1.msra.mxu0 %v163
    %199 = vmatprep.subr.mxu0 0.0
    %200 = vmatpush1.msra.mxu0 %v164
    %201 = vmatprep.subr.mxu0 0.0
    %202 = vmatpush1.msra.mxu0 %v165
    %203 = vmatprep.subr.mxu0 0.0
    %204 = vmatpush1.msra.mxu0 0.0
    %205 = vmatprep.subr.mxu0 0.0
    %206 = vmatpush1.msra.mxu0 0.0
    %207 = vmatprep.subr.mxu0 0.0
    %208 = vmatpush1.msra.mxu0 0.0
    %209 = vmatprep.subr.mxu0 0.0
    %210 = vmatpush1.msra.mxu0 0.0
    %211 = vmatprep.subr.mxu0 0.0
    %212 = vmatpush1.msra.mxu0 0.0
    %213 = vmatprep.subr.mxu0 0.0
    %214 = vmatpush1.msra.mxu0 0.0
    %215 = vmatprep.subr.mxu0 0.0
    %216 = vmatpush1.msra.mxu0 0.0
    %217 = vmatprep.subr.mxu0 0.0
    %218 = vmatpush1.msra.mxu0 0.0
    %219 = vmatprep.subr.mxu0 0.0
    %220 = vmatpush1.msra.mxu0 0.0
    %221 = vmatprep.subr.mxu0 0.0
    %222 = vmatpush1.msra.mxu0 0.0
    %223 = vmatprep.subr.mxu0 0.0
    %224 = vmatpush1.msra.mxu0 0.0
    %225 = vmatprep.subr.mxu0 0.0
    %226 = vmatpush1.msra.mxu0 0.0
    %227 = vmatprep.subr.mxu0 0.0
    %228 = vmatpush1.msra.mxu0 0.0
    %229 = vmatprep.subr.mxu0 0.0
    %230 = vmatpush1.msra.mxu0 0.0
    %231 = vmatprep.subr.mxu0 0.0
    %232 = vmatpush1.msra.mxu0 0.0
    %233 = vmatprep.subr.mxu0 0.0
    %234 = vmatpush1.msra.mxu0 0.0
    %235 = vmatprep.mubr.f32.mxu0 0.0
    %236 = vmatmul.mubr.f32.gmra.mrb[0].mxu0 %v149
    %v237 = vpop.f32.mrb[0].mxu0
    %v238 = vadd.f32 %v170, %v237
    %v239 = vpop.f32.mrb[0].mxu0
    %240 = vdwg.mxu0
    %v241 = vadd.f32 %v238, %v57
    %v242 = vmax.f32 %v241, 0.0
    %243 = vst [vmem:[#allocation8] sm:$0xff] %v242
    // Predicated region
    $region30: #{tpu_custom_call.1} parent=1 // pred_check
      _
    $region31: #{tpu_custom_call.1} parent=1 // pred_check_branch
      %245 = sbr.rel (0) target = $region33
    $region32: #{tpu_custom_call.1} parent=1 // pred_region
      %s247 = ssub.s32 128, 128
      %248 = vsyncadd [#allocation4], %s247
      %s250 = sshll.u32 [#allocation8], 4
      %s251 = int_to_ptr.vmem [resolvable:$true] %s250
      %253 = dma.vmem_to_hbm [thread:$0]  %s251, 128, %s4, [#allocation4]
    $region33: #{tpu_custom_call.1} parent=1 // pred_fallthru
      _
    // Predicated region
    $region34: #{tpu_custom_call.1} parent=1 // pred_check
      _
    $region35: #{tpu_custom_call.1} parent=1 // pred_check_branch
      %255 = sbr.rel (0) target = $region37
    $region36: #{tpu_custom_call.1} parent=1 // pred_region
      %256 = dma.done [#allocation4], 128
    $region37: #{tpu_custom_call.1} parent=1 // pred_fallthru
      _
    %257 = vsyncpa [#allocation3], 1
    %258 = vsyncpa [#allocation6], 1
    %259 = vsyncpa [#allocation4], 1

</llo_original>
